<compile_context>
chip_gen: v7x
topology: tpu7x:2x2x1
jax: 0.10.0
libtpu: 0.0.40
codegen_flags: <defaults>
</compile_context>

<pallas_src>
import functools
import math

import jax
import jax.numpy as jnp
from jax.experimental import pallas as pl
from jax.experimental.pallas import tpu as pltpu


def _round_up(x, m):
    return (x + m - 1) // m * m


def _vmem_limit_bytes():
    """~75% of physical VMEM (48 MiB on v7x, 96 MiB on v5e/v6e)."""
    try:
        cap = pltpu.get_tpu_info().vmem_capacity_bytes
    except Exception:  # conservative default = v7x (64 MiB physical)
        cap = 64 * 1024 * 1024
    return int(cap * 3 // 4)


def _pick_row_tile(n_pad, cap):
    """Largest power-of-two row tile <= cap dividing the padded extent."""
    for t in (1024, 512, 256, 128, 64, 32, 16, 8):
        if t <= cap and n_pad % t == 0:
            return t
    return n_pad


# ---------------------------------------------------------------------------
# Kernel 1: batched (all heads, all relations sharing a node type) projection
#   y = x @ W + b     x: [N_pad, in_dim] bf16, W: [in_dim, width_pad] bf16,
#                     b: [1, width_pad] f32, width_pad % 128 == 0
# ---------------------------------------------------------------------------
def _fused_proj_kernel(x_ref, w_ref, b_ref, o_ref):
    o_ref[...] = (
        jnp.dot(x_ref[...], w_ref[...], preferred_element_type=jnp.float32)
        + b_ref[...]
    )


def fused_projection(x, w, b, *, tile_n, vmem_limit):
    n_pad, in_dim = x.shape
    width = w.shape[1]
    return pl.pallas_call(
        _fused_proj_kernel,
        out_shape=jax.ShapeDtypeStruct((n_pad, width), jnp.float32),
        grid_spec=pltpu.PrefetchScalarGridSpec(
            num_scalar_prefetch=0,
            grid=(n_pad // tile_n,),
            in_specs=[
                pl.BlockSpec((tile_n, in_dim), lambda i: (i, 0)),
                pl.BlockSpec((in_dim, width), lambda i: (0, 0)),
                pl.BlockSpec((1, width), lambda i: (0, 0)),
            ],
            out_specs=pl.BlockSpec((tile_n, width), lambda i: (i, 0)),
        ),
        compiler_params=pltpu.CompilerParams(
            dimension_semantics=("parallel",),
            vmem_limit_bytes=vmem_limit,
        ),
    )(x, w, b)


# ---------------------------------------------------------------------------
# Kernel 2: per-(dst-tile, head) masked edge_softmax.
#   q:    [H, N_dst_pad, d_k]      (rel_pri / sqrt(d_k) already folded in)
#   kpT:  [H, d_k, N_src_pad]      (relation_att already folded in; lane-dense)
#   mask: [N_dst_pad, N_src_pad]   int8 (1 = edge)
#   out:  [H, N_dst_pad, N_src_pad] bf16 attention probabilities
# ---------------------------------------------------------------------------
def _hatt_attn_kernel(q_ref, kpT_ref, mask_ref, attn_ref, *, lowf):
    q = q_ref[0]                      # [tile_dst, d_k]
    kpT = kpT_ref[0]                  # [d_k, N_src_pad]
    edge = mask_ref[...] != 0         # int8 compare, no widening

    # per-edge dot product v_dot_u('q','k'); scale pre-folded into q
    s = jnp.dot(q, kpT, preferred_element_type=jnp.float32)   # [tile_dst, N_src]
    if not lowf:
        s = pl.reciprocal(s + jnp.float32(1e-6))               # (score+1e-6)**-1

    # edge_softmax(norm_by='dst'): masked softmax over the src axis.
    # Single select; masked entries underflow to exactly 0 after exp.
    # Rows with zero edges (incl. dst padding rows) come out uniform
    # (1/N_src_pad) — safe because such rows are never gathered downstream.
    s_masked = jnp.where(edge, s, jnp.float32(-1e30))
    mx = jnp.max(s_masked, axis=-1, keepdims=True)
    p = jnp.exp(s_masked - mx)
    denom = jnp.sum(p, axis=-1, keepdims=True)      # >= 1 (the max term is 1)
    inv = pl.reciprocal(denom, approx=True)
    attn_ref[0] = (p * inv).astype(attn_ref.dtype)


def _pick_dst_tile(n_dst_pad, n_src_pad, d_k, budget_bytes):
    def footprint(t):
        per = t * n_src_pad
        # double-buffered mask(int8) + out(bf16) + q(f32) + kpT(f32) blocks,
        # plus ~2 f32 score-sized softmax temporaries.
        return (2 * (per * 1 + per * 2 + t * d_k * 4 + d_k * n_src_pad * 4)
                + 2 * per * 4)

    for t in [n_dst_pad] + [c for c in (512, 256, 128, 64, 32, 16, 8)
                            if c < n_dst_pad]:
        if n_dst_pad % t == 0 and footprint(t) <= budget_bytes:
            return t
    # TODO(synk): for very large N_src_pad add a src grid axis with an online
    # (flash-style) softmax so the block footprint is bounded by tile_src.
    return 8


def hatt_attention(q_heads, kpT_heads, mask, *, lowf=True):
    n_heads, n_dst_pad, d_k = q_heads.shape
    n_src_pad = kpT_heads.shape[2]
    vmem_limit = _vmem_limit_bytes()
    tile_dst = _pick_dst_tile(n_dst_pad, n_src_pad, d_k, (vmem_limit * 4) // 5)
    kernel = functools.partial(_hatt_attn_kernel, lowf=lowf)
    return pl.pallas_call(
        kernel,
        out_shape=jax.ShapeDtypeStruct((n_heads, n_dst_pad, n_src_pad),
                                       jnp.bfloat16),
        grid_spec=pltpu.PrefetchScalarGridSpec(
            num_scalar_prefetch=0,
            # head is the innermost ("arbitrary") axis so the mask block index
            # is constant across it -> mask stays VMEM-resident per dst tile
            # and megacore only shards the dst-tile axis.
            grid=(n_dst_pad // tile_dst, n_heads),
            in_specs=[
                pl.BlockSpec((1, tile_dst, d_k), lambda i, h: (h, i, 0)),
                pl.BlockSpec((1, d_k, n_src_pad), lambda i, h: (h, 0, 0)),
                pl.BlockSpec((tile_dst, n_src_pad), lambda i, h: (i, 0)),
            ],
            out_specs=pl.BlockSpec((1, tile_dst, n_src_pad),
                                   lambda i, h: (h, i, 0)),
        ),
        compiler_params=pltpu.CompilerParams(
            dimension_semantics=("parallel", "arbitrary"),
            vmem_limit_bytes=vmem_limit,
        ),
    )(q_heads, kpT_heads, mask)


# ---------------------------------------------------------------------------
# JAX glue: weight fusion (relation_att / rel_pri folded into the projections)
# ---------------------------------------------------------------------------
def split_heads(weight, bias, n_heads, d_k):
    """torch Linear weight [out,in], bias [out] -> ([H,in,d_k], [H,d_k])."""
    in_dim = weight.shape[1]
    w_h = jnp.transpose(weight.T.reshape(in_dim, n_heads, d_k), (1, 0, 2))
    b_h = bias.reshape(n_heads, d_k)
    return w_h, b_h


def fuse_k_relation(weight, bias, rel_att, n_heads, d_k):
    """Fold relation_att into the K projection -> [in_dim, H*d_k] columns."""
    w_h, b_h = split_heads(weight, bias, n_heads, d_k)
    w_rel = jnp.einsum('hid,hdk->hik', w_h, rel_att)          # [H, in, d_k]
    b_rel = jnp.einsum('hd,hdk->hk', b_h, rel_att)            # [H, d_k]
    in_dim = weight.shape[1]
    return (jnp.transpose(w_rel, (1, 0, 2)).reshape(in_dim, n_heads * d_k),
            b_rel.reshape(n_heads * d_k))


def fuse_q_scale(weight, bias, rel_pri, n_heads, d_k):
    """Fold rel_pri / sqrt(d_k) into the Q projection."""
    w_h, b_h = split_heads(weight, bias, n_heads, d_k)
    scale = rel_pri / math.sqrt(d_k)                           # [H]
    w_s = w_h * scale[:, None, None]
    b_s = b_h * scale[:, None]
    in_dim = weight.shape[1]
    return (jnp.transpose(w_s, (1, 0, 2)).reshape(in_dim, n_heads * d_k),
            b_s.reshape(n_heads * d_k))


def hatt_forward(canonical_etypes, edges, num_nodes, h,
                 k_weights, k_biases, q_weights, q_biases,
                 relation_att, relation_pri, node_dict, edge_dict,
                 *, n_heads, d_k, lowf=True):
    """Mirrors HATT.forward: returns {etype: [E, H, 1]} attention scores."""
    hd = n_heads * d_k
    vmem_limit = _vmem_limit_bytes()
    # bigger projection row tiles when VMEM allows (v5e/v6e), 512 cap on v7x
    row_tile_cap = 1024 if vmem_limit > 64 * 1024 * 1024 else 512

    # ---- Phase 1: per node type, batch every projection reading its feature
    # matrix into one lane-dense (width padded to 128) bf16 matmul. ----
    proj_cols = {}
    for srctype, etype, dsttype in canonical_etypes:
        e_id = edge_dict[etype]
        wkp, bkp = fuse_k_relation(k_weights[node_dict[srctype]],
                                   k_biases[node_dict[srctype]],
                                   relation_att[e_id], n_heads, d_k)
        wq, bq = fuse_q_scale(q_weights[node_dict[dsttype]],
                              q_biases[node_dict[dsttype]],
                              relation_pri[e_id], n_heads, d_k)
        proj_cols.setdefault(srctype, []).append((('k', etype), wkp, bkp))
        proj_cols.setdefault(dsttype, []).append((('q', etype), wq, bq))

    node_pad = {}
    proj_out = {}
    for ntype, cols in proj_cols.items():
        n = num_nodes[ntype]
        n_pad = _round_up(max(n, 1), 128)   # 128 works as src (lane) or dst axis
        node_pad[ntype] = n_pad
        in_dim = h[ntype].shape[1]

        w_cat = jnp.concatenate([w for _, w, _ in cols], axis=1)
        b_cat = jnp.concatenate([b for _, _, b in cols], axis=0)
        width = w_cat.shape[1]
        width_pad = _round_up(width, 128)   # lane-dense (unmasked) output stores
        if width_pad > width:
            w_cat = jnp.pad(w_cat, ((0, 0), (0, width_pad - width)))
            b_cat = jnp.pad(b_cat, ((0, width_pad - width),))

        x = jnp.zeros((n_pad, in_dim), jnp.float32).at[:n].set(h[ntype])
        # bf16 matmul operands (f32 accumulation); softmax math stays f32.
        y = fused_projection(x.astype(jnp.bfloat16),
                             w_cat.astype(jnp.bfloat16),
                             b_cat.reshape(1, width_pad),
                             tile_n=_pick_row_tile(n_pad, row_tile_cap),
                             vmem_limit=vmem_limit)
        for i, (key, _, _) in enumerate(cols):
            proj_out[key] = y[:, i * hd:(i + 1) * hd]

    # ---- Phase 2: per canonical edge type, masked edge_softmax kernel. ----
    etype_att = {}
    for srctype, etype, dsttype in canonical_etypes:
        src_idx, dst_idx = edges[etype]
        n_src_pad = node_pad[srctype]
        n_dst_pad = node_pad[dsttype]

        kp_all = proj_out[('k', etype)]                       # [n_src_pad, hd]
        q_all = proj_out[('q', etype)]                        # [n_dst_pad, hd]
        # lane-dense, MXU-oriented kp layout: [H, d_k, N_src_pad]
        kpT_heads = jnp.transpose(kp_all.reshape(n_src_pad, n_heads, d_k),
                                  (1, 2, 0))
        q_heads = jnp.transpose(q_all.reshape(n_dst_pad, n_heads, d_k),
                                (1, 0, 2))

        # Dense adjacency mask.  NOTE: parallel multi-edges between the same
        # (src, dst) pair collapse onto a single mask entry.
        mask = (jnp.zeros((n_dst_pad, n_src_pad), jnp.int32)
                .at[dst_idx, src_idx].set(1).astype(jnp.int8))

        attn_dense = hatt_attention(q_heads, kpT_heads, mask, lowf=lowf)

        # TODO(synk): gather per-edge scores inside the kernel (scalar-prefetched
        # edge indices -> [E, H] output) to avoid writing the dense bf16 tensor.
        attn_edges = attn_dense[:, dst_idx, src_idx].astype(jnp.float32)  # [H,E]
        etype_att[etype] = attn_edges.T[:, :, None]                       # [E,H,1]
    return etype_att


# ---------------------------------------------------------------------------
# Pure-JAX reference (mirrors the PyTorch module) for a correctness check.
# ---------------------------------------------------------------------------
def hatt_reference(canonical_etypes, edges, num_nodes, h,
                   k_weights, k_biases, q_weights, q_biases,
                   relation_att, relation_pri, node_dict, edge_dict,
                   *, n_heads, d_k, lowf=True):
    out = {}
    sqrt_dk = math.sqrt(d_k)
    for srctype, etype, dsttype in canonical_etypes:
        src_idx, dst_idx = edges[etype]
        n_dst = num_nodes[dsttype]
        t_src, t_dst, e_id = node_dict[srctype], node_dict[dsttype], edge_dict[etype]
        k = (h[srctype] @ k_weights[t_src].T + k_biases[t_src]).reshape(-1, n_heads, d_k)
        q = (h[dsttype] @ q_weights[t_dst].T + q_biases[t_dst]).reshape(-1, n_heads, d_k)
        kp = jnp.einsum('bij,ijk->bik', k, relation_att[e_id])
        score = (q[dst_idx] * kp[src_idx]).sum(-1) * relation_pri[e_id] / sqrt_dk
        if not lowf:
            score = 1.0 / (score + 1e-6)
        mx = jax.ops.segment_max(score, dst_idx, num_segments=n_dst)
        p = jnp.exp(score - mx[dst_idx])
        denom = jax.ops.segment_sum(p, dst_idx, num_segments=n_dst)
        out[etype] = (p / denom[dst_idx])[:, :, None]
    return out


if __name__ == "__main__":
    in_dim, out_dim, n_heads = 16, 32, 4
    d_k = out_dim // n_heads

    node_dict = {'author': 0, 'paper': 1}
    edge_dict = {'writes': 0, 'cites': 1}
    canonical_etypes = [('author', 'writes', 'paper'),
                        ('paper', 'cites', 'paper')]
    num_nodes = {'author': 6, 'paper': 8}
    # (src_idx, dst_idx); multiple incoming edges per dst to exercise the softmax
    edges = {
        'writes': (jnp.array([0, 1, 2, 3, 4, 5, 0, 1], dtype=jnp.int32),
                   jnp.array([0, 0, 1, 1, 2, 2, 3, 3], dtype=jnp.int32)),
        'cites':  (jnp.array([1, 2, 3, 4, 5, 6, 7, 0], dtype=jnp.int32),
                   jnp.array([0, 0, 1, 1, 2, 2, 3, 3], dtype=jnp.int32)),
    }
    num_types = len(node_dict)
    num_relations = len(edge_dict)

    key = jax.random.PRNGKey(0)
    keys = iter(jax.random.split(key, 4 * num_types + 3))
    k_weights = [0.1 * jax.random.normal(next(keys), (out_dim, in_dim), jnp.float32)
                 for _ in range(num_types)]
    k_biases = [0.1 * jax.random.normal(next(keys), (out_dim,), jnp.float32)
                for _ in range(num_types)]
    q_weights = [0.1 * jax.random.normal(next(keys), (out_dim, in_dim), jnp.float32)
                 for _ in range(num_types)]
    q_biases = [0.1 * jax.random.normal(next(keys), (out_dim,), jnp.float32)
                for _ in range(num_types)]
    relation_pri = jnp.ones((num_relations, n_heads), jnp.float32)
    xav = math.sqrt(6.0 / (d_k + d_k))
    relation_att = jax.random.uniform(next(keys),
                                      (num_relations, n_heads, d_k, d_k),
                                      jnp.float32, minval=-xav, maxval=xav)

    h = {'author': jax.random.normal(next(keys), (num_nodes['author'], in_dim), jnp.float32),
         'paper':  jax.random.normal(next(keys), (num_nodes['paper'], in_dim), jnp.float32)}

    etype_att = hatt_forward(canonical_etypes, edges, num_nodes, h,
                             k_weights, k_biases, q_weights, q_biases,
                             relation_att, relation_pri, node_dict, edge_dict,
                             n_heads=n_heads, d_k=d_k, lowf=True)
    ref_att = hatt_reference(canonical_etypes, edges, num_nodes, h,
                             k_weights, k_biases, q_weights, q_biases,
                             relation_att, relation_pri, node_dict, edge_dict,
                             n_heads=n_heads, d_k=d_k, lowf=True)

    for srctype, etype, dsttype in canonical_etypes:
        src_idx, dst_idx = edges[etype]
        att = jax.block_until_ready(etype_att[etype])
        assert att.shape == (src_idx.shape[0], n_heads, 1)
        # edge_softmax rows (grouped by dst) must sum to ~1
        sums = jax.ops.segment_sum(att[:, :, 0], dst_idx,
                                   num_segments=num_nodes[dsttype])
        cnts = jax.ops.segment_sum(jnp.ones_like(dst_idx, jnp.float32), dst_idx,
                                   num_segments=num_nodes[dsttype])
        norm_err = float(jnp.max(jnp.where(cnts[:, None] > 0,
                                           jnp.abs(sums - 1.0), 0.0)))
        assert norm_err < 1.5e-2, f"edge_softmax not normalised for {etype}: {norm_err}"
        # compare with the pure-JAX reference (bf16 matmuls + bf16 output +
        # approx reciprocal -> loose tolerance)
        err = float(jnp.max(jnp.abs(att - ref_att[etype])))
        assert err < 2.5e-2, f"mismatch vs reference for {etype}: {err}"

    print("KERNEL_OK")
</pallas_src>

<mosaic_0001>
module attributes {stable_mosaic.version = 11 : i64} {
  func.func @_fused_proj_kernel(%arg0: i32, %arg1: memref<128x16xbf16, #tpu.memory_space<vmem>>, %arg2: memref<16x128xbf16, #tpu.memory_space<vmem>>, %arg3: memref<1x128xf32, #tpu.memory_space<vmem>>, %arg4: memref<128x128xf32, #tpu.memory_space<vmem>>) attributes {dimension_semantics = [#tpu.dimension_semantics<parallel>], iteration_bounds = array<i64: 1>, scalar_prefetch = 0 : i64, scratch_operands = 0 : i64, tpu.core_type = #tpu.core_type<tc>, window_params = [{transform_indices = @transform_0, window_bounds = array<i64: 128, 16>}, {pipeline_mode = #tpu.pipeline_mode<synchronous>, transform_indices = @transform_1, window_bounds = array<i64: 16, 128>}, {pipeline_mode = #tpu.pipeline_mode<synchronous>, transform_indices = @transform_2, window_bounds = array<i64: 1, 128>}, {transform_indices = @transform_3, window_bounds = array<i64: 128, 128>}]} {
    %c0 = arith.constant 0 : index
    %c0_0 = arith.constant 0 : index
    %0 = vector.load %arg1[%c0, %c0_0] : memref<128x16xbf16, #tpu.memory_space<vmem>>, vector<128x16xbf16>
    %c0_1 = arith.constant 0 : index
    %c0_2 = arith.constant 0 : index
    %1 = vector.load %arg2[%c0_1, %c0_2] : memref<16x128xbf16, #tpu.memory_space<vmem>>, vector<16x128xbf16>
    %cst = arith.constant dense<0.000000e+00> : vector<128x128xf32>
    %2 = tpu.matmul %0, %1, %cst {dimension_numbers = #tpu.dot_dimension_numbers<[1], [0], [0], [1], [0, 0, 1, 1], [], []>} : vector<128x16xbf16>, vector<16x128xbf16>, vector<128x128xf32> -> vector<128x128xf32>
    %c0_3 = arith.constant 0 : index
    %c0_4 = arith.constant 0 : index
    %3 = vector.load %arg3[%c0_3, %c0_4] : memref<1x128xf32, #tpu.memory_space<vmem>>, vector<1x128xf32>
    %4 = vector.broadcast %3 : vector<1x128xf32> to vector<128x128xf32>
    %5 = arith.addf %2, %4 : vector<128x128xf32>
    %c0_5 = arith.constant 0 : index
    %c0_6 = arith.constant 0 : index
    %6 = vector.load %arg4[%c0_5, %c0_6] : memref<128x128xf32, #tpu.memory_space<vmem>>, vector<128x128xf32>
    tpu.vector_store %arg4[%c0_5, %c0_6], %5 {strides = array<i32>} : memref<128x128xf32, #tpu.memory_space<vmem>>, vector<128x128xf32>,
    return
  }
  func.func @transform_0(%arg0: i32) -> (i32, i32) {
    %c0_i32 = arith.constant 0 : i32
    %c0_i32_0 = arith.constant 0 : i32
    return %arg0, %c0_i32 : i32, i32
  }
  func.func @transform_1(%arg0: i32) -> (i32, i32) {
    %c0_i32 = arith.constant 0 : i32
    %c0_i32_0 = arith.constant 0 : i32
    %c0_i32_1 = arith.constant 0 : i32
    return %c0_i32, %c0_i32_0 : i32, i32
  }
  func.func @transform_2(%arg0: i32) -> (i32, i32) {
    %c0_i32 = arith.constant 0 : i32
    %c0_i32_0 = arith.constant 0 : i32
    %c0_i32_1 = arith.constant 0 : i32
    return %c0_i32, %c0_i32_0 : i32, i32
  }
  func.func @transform_3(%arg0: i32) -> (i32, i32) {
    %c0_i32 = arith.constant 0 : i32
    %c0_i32_0 = arith.constant 0 : i32
    return %arg0, %c0_i32 : i32, i32
  }
}

</mosaic_0001>

<llo_original>
// kernel: tpu_custom_call.1
$region0: #{tpu_custom_call.1}
  #allocation0 [shape = 'u32[]', space=smem, size = 0x4, offset = 0x4, fixed_abs, tag = 'smem constant byte address 0x4 - core index']
  #allocation1 [shape = 'u32[144,128]{1,0:T(1,128)}', space=vmem, size = 0x12000, scoped, tag = 'internal scratch']
  %s0 = inlined_call_operand.vmem [shape: bf16[128,16], index: 0, kind: input, shape index: {}]
  %s1 = inlined_call_operand.vmem [shape: bf16[16,128], index: 1, kind: input, shape index: {}]
  %s2 = inlined_call_operand.vmem [shape: f32[1,128], index: 2, kind: input, shape index: {}]
  %s3 = inlined_call_operand.hbm [shape: f32[128,128], index: 3, kind: output, shape index: {}]
  %s4 = sld [smem:[#allocation0]]
  $region22: #{tpu_custom_call.1} parent=0
    _
  %s6 = ssub.s32 1, %s4
  %s7 = scalar_select 0, %s6, %s4
  $region1: #{tpu_custom_call.1} parent=0
    #allocation2 [shape = 'u8[65536]{0}', space=vmem, size = 0x10000, scoped, tag = 'output window, operand 0, single buffered']
    #allocation3 [shape = 's32[1]{0}', space=sflag, size = 0x4, scoped, tag = 'scoped memory for tpu_custom_call.1']
    %8 = vsyncpa [#allocation3], 0
    // Predicated region
    $region2: #{tpu_custom_call.1} parent=1 // pred_check
      _
    $region3: #{tpu_custom_call.1} parent=1 // pred_check_branch
      %10 = sbr.rel (0) target = $region5
    $region4: #{tpu_custom_call.1} parent=1 // pred_region
      _
    $region5: #{tpu_custom_call.1} parent=1 // pred_fallthru
      _
    // Predicated region
    $region6: #{tpu_custom_call.1} parent=1 // pred_check
      _
    $region7: #{tpu_custom_call.1} parent=1 // pred_check_branch
      %12 = sbr.rel (0) target = $region9
    $region8: #{tpu_custom_call.1} parent=1 // pred_region
      _
    $region9: #{tpu_custom_call.1} parent=1 // pred_fallthru
      _
    // Predicated region
    $region10: #{tpu_custom_call.1} parent=1 // pred_check
      _
    $region11: #{tpu_custom_call.1} parent=1 // pred_check_branch
      %14 = sbr.rel (0) target = $region13
    $region12: #{tpu_custom_call.1} parent=1 // pred_region
      _
    $region13: #{tpu_custom_call.1} parent=1 // pred_fallthru
      _
    %v16 = vld [vmem:[%s0] sm:$0xf]
    %v17 = vld [vmem:[%s0 + $0x4] sm:$0xf]
    %v18 = vld [vmem:[%s0 + $0x8] sm:$0xf]
    %v19 = vld [vmem:[%s0 + $0xc] sm:$0xf]
    %v20 = vld [vmem:[%s0 + $0x10] sm:$0xf]
    %v21 = vld [vmem:[%s0 + $0x14] sm:$0xf]
    %v22 = vld [vmem:[%s0 + $0x18] sm:$0xf]
    %v23 = vld [vmem:[%s0 + $0x1c] sm:$0xf]
    %v24 = vld [vmem:[%s0 + $0x20] sm:$0xf]
    %v25 = vld [vmem:[%s0 + $0x24] sm:$0xf]
    %v26 = vld [vmem:[%s0 + $0x28] sm:$0xf]
    %v27 = vld [vmem:[%s0 + $0x2c] sm:$0xf]
    %v28 = vld [vmem:[%s0 + $0x30] sm:$0xf]
    %v29 = vld [vmem:[%s0 + $0x34] sm:$0xf]
    %v30 = vld [vmem:[%s0 + $0x38] sm:$0xf]
    %v31 = vld [vmem:[%s0 + $0x3c] sm:$0xf]
    %v32 = vld [vmem:[%s1] sm:$0xf]
    %v33 = vld [vmem:[%s1 + $0x4] sm:$0xf]
    %v34 = vld [vmem:[%s2] sm:$0x1]
    %v36 = vlaneseq
    %v37 = vshrl.u32 %v36, 7
    %v38 = vsub.s32 0, %v37
    %v39 = vrot.slane %v34, %v38
    %v57 = vunpack.c.l.b16 %v16
    %v58 = vunpack.c.l.b16 %v17
    %v59 = vunpack.c.l.b16 %v18
    %v60 = vunpack.c.l.b16 %v19
    %v61 = vunpack.c.l.b16 %v20
    %v62 = vunpack.c.l.b16 %v21
    %v63 = vunpack.c.l.b16 %v22
    %v64 = vunpack.c.l.b16 %v23
    %v65 = vunpack.c.l.b16 %v24
    %v66 = vunpack.c.l.b16 %v25
    %v67 = vunpack.c.l.b16 %v26
    %v68 = vunpack.c.l.b16 %v27
    %v69 = vunpack.c.l.b16 %v28
    %v70 = vunpack.c.l.b16 %v29
    %v71 = vunpack.c.l.b16 %v30
    %v72 = vunpack.c.l.b16 %v31
    %v73 = vpack.c.b16 %v58, %v57
    %v74 = vpack.c.b16 %v60, %v59
    %v75 = vpack.c.b16 %v62, %v61
    %v76 = vpack.c.b16 %v64, %v63
    %v77 = vpack.c.b16 %v66, %v65
    %v78 = vpack.c.b16 %v68, %v67
    %v79 = vpack.c.b16 %v70, %v69
    %v80 = vpack.c.b16 %v72, %v71
    %v83 = vunpack.c.l.b16 %v32
    %v84 = vunpack.c.l.b16 %v33
    %v85 = vpack.c.b16 %v84, %v83
    %vm87 = vcmask 130048
    %v89 = vsel %vm87, %v73, 0
    %v92 = vsel %vm87, %v74, 0
    %v95 = vsel %vm87, %v75, 0
    %v98 = vsel %vm87, %v76, 0
    %v101 = vsel %vm87, %v77, 0
    %v104 = vsel %vm87, %v78, 0
    %v107 = vsel %vm87, %v79, 0
    %v110 = vsel %vm87, %v80, 0
    %112 = vmatprep.subr.bf16.mxu0 0
    %113 = vmatpush1.bf16.msra.mxu0 %v85
    %114 = vmatprep.subr.bf16.mxu0 0
    %115 = vmatpush1.bf16.msra.mxu0 0
    %116 = vmatprep.subr.bf16.mxu0 0
    %117 = vmatpush1.bf16.msra.mxu0 0
    %118 = vmatprep.subr.bf16.mxu0 0
    %119 = vmatpush1.bf16.msra.mxu0 0
    %120 = vmatprep.subr.bf16.mxu0 0
    %121 = vmatpush1.bf16.msra.mxu0 0
    %122 = vmatprep.subr.bf16.mxu0 0
    %123 = vmatpush1.bf16.msra.mxu0 0
    %124 = vmatprep.subr.bf16.mxu0 0
    %125 = vmatpush1.bf16.msra.mxu0 0
    %126 = vmatprep.subr.bf16.mxu0 0
    %127 = vmatpush1.bf16.msra.mxu0 0
    %128 = vmatprep.subr.bf16.mxu0 0
    %129 = vmatpush1.bf16.msra.mxu0 0
    %130 = vmatprep.subr.bf16.mxu0 0
    %131 = vmatpush1.bf16.msra.mxu0 0
    %132 = vmatprep.subr.bf16.mxu0 0
    %133 = vmatpush1.bf16.msra.mxu0 0
    %134 = vmatprep.subr.bf16.mxu0 0
    %135 = vmatpush1.bf16.msra.mxu0 0
    %136 = vmatprep.subr.bf16.mxu0 0
    %137 = vmatpush1.bf16.msra.mxu0 0
    %138 = vmatprep.subr.bf16.mxu0 0
    %139 = vmatpush1.bf16.msra.mxu0 0
    %140 = vmatprep.subr.bf16.mxu0 0
    %141 = vmatpush1.bf16.msra.mxu0 0
    %142 = vmatprep.subr.bf16.mxu0 0
    %143 = vmatpush1.bf16.msra.mxu0 0
    %144 = vmatprep.mubr.bf16.mxu0 0
    %145 = vmatmul.mubr.bf16.gmra.mrb[0].mxu0 %v89
    %v146 = vpop.f32.mrb[0].mxu0
    %v147 = vadd.f32 %v39, %v146
    %v148 = vpop.f32.mrb[0].mxu0
    %v149 = vpop.f32.mrb[0].mxu0
    %v150 = vadd.f32 %v39, %v149
    %v151 = vpop.f32.mrb[0].mxu0
    %152 = vmatprep.mubr.bf16.mxu0 0
    %153 = vmatmul.mubr.bf16.gmra.mrb[0].mxu0 %v92
    %v154 = vpop.f32.mrb[0].mxu0
    %v155 = vadd.f32 %v39, %v154
    %v156 = vpop.f32.mrb[0].mxu0
    %v157 = vpop.f32.mrb[0].mxu0
    %v158 = vadd.f32 %v39, %v157
    %v159 = vpop.f32.mrb[0].mxu0
    %160 = vmatprep.mubr.bf16.mxu0 0
    %161 = vmatmul.mubr.bf16.gmra.mrb[0].mxu0 %v95
    %v162 = vpop.f32.mrb[0].mxu0
    %v163 = vadd.f32 %v39, %v162
    %v164 = vpop.f32.mrb[0].mxu0
    %v165 = vpop.f32.mrb[0].mxu0
    %v166 = vadd.f32 %v39, %v165
    %v167 = vpop.f32.mrb[0].mxu0
    %168 = vmatprep.mubr.bf16.mxu0 0
    %169 = vmatmul.mubr.bf16.gmra.mrb[0].mxu0 %v98
    %v170 = vpop.f32.mrb[0].mxu0
    %v171 = vadd.f32 %v39, %v170
    %v172 = vpop.f32.mrb[0].mxu0
    %v173 = vpop.f32.mrb[0].mxu0
    %v174 = vadd.f32 %v39, %v173
    %v175 = vpop.f32.mrb[0].mxu0
    %176 = vmatprep.mubr.bf16.mxu0 0
    %177 = vmatmul.mubr.bf16.gmra.mrb[0].mxu0 %v101
    %v178 = vpop.f32.mrb[0].mxu0
    %v179 = vadd.f32 %v39, %v178
    %v180 = vpop.f32.mrb[0].mxu0
    %v181 = vpop.f32.mrb[0].mxu0
    %v182 = vadd.f32 %v39, %v181
    %v183 = vpop.f32.mrb[0].mxu0
    %184 = vmatprep.mubr.bf16.mxu0 0
    %185 = vmatmul.mubr.bf16.gmra.mrb[0].mxu0 %v104
    %v186 = vpop.f32.mrb[0].mxu0
    %v187 = vadd.f32 %v39, %v186
    %v188 = vpop.f32.mrb[0].mxu0
    %v189 = vpop.f32.mrb[0].mxu0
    %v190 = vadd.f32 %v39, %v189
    %v191 = vpop.f32.mrb[0].mxu0
    %192 = vmatprep.mubr.bf16.mxu0 0
    %193 = vmatmul.mubr.bf16.gmra.mrb[0].mxu0 %v107
    %v194 = vpop.f32.mrb[0].mxu0
    %v195 = vadd.f32 %v39, %v194
    %v196 = vpop.f32.mrb[0].mxu0
    %v197 = vpop.f32.mrb[0].mxu0
    %v198 = vadd.f32 %v39, %v197
    %v199 = vpop.f32.mrb[0].mxu0
    %200 = vmatprep.mubr.bf16.mxu0 0
    %201 = vmatmul.mubr.bf16.gmra.mrb[0].mxu0 %v110
    %v202 = vpop.f32.mrb[0].mxu0
    %v203 = vadd.f32 %v39, %v202
    %v204 = vpop.f32.mrb[0].mxu0
    %v205 = vpop.f32.mrb[0].mxu0
    %v206 = vadd.f32 %v39, %v205
    %v207 = vpop.f32.mrb[0].mxu0
    %208 = vdwg.mxu0
    %209 = vst [vmem:[#allocation2] sm:$0xff] %v147
    %210 = vst [vmem:[#allocation2 + $0x8] sm:$0xff] %v150
    %211 = vst [vmem:[#allocation2 + $0x10] sm:$0xff] %v155
    %212 = vst [vmem:[#allocation2 + $0x18] sm:$0xff] %v158
    %213 = vst [vmem:[#allocation2 + $0x20] sm:$0xff] %v163
    %214 = vst [vmem:[#allocation2 + $0x28] sm:$0xff] %v166
    %215 = vst [vmem:[#allocation2 + $0x30] sm:$0xff] %v171
    %216 = vst [vmem:[#allocation2 + $0x38] sm:$0xff] %v174
    %217 = vst [vmem:[#allocation2 + $0x40] sm:$0xff] %v179
    %218 = vst [vmem:[#allocation2 + $0x48] sm:$0xff] %v182
    %219 = vst [vmem:[#allocation2 + $0x50] sm:$0xff] %v187
    %220 = vst [vmem:[#allocation2 + $0x58] sm:$0xff] %v190
    %221 = vst [vmem:[#allocation2 + $0x60] sm:$0xff] %v195
    %222 = vst [vmem:[#allocation2 + $0x68] sm:$0xff] %v198
    %223 = vst [vmem:[#allocation2 + $0x70] sm:$0xff] %v203
    %224 = vst [vmem:[#allocation2 + $0x78] sm:$0xff] %v206
    // Predicated region
    $region14: #{tpu_custom_call.1} parent=1 // pred_check
      _
    $region15: #{tpu_custom_call.1} parent=1 // pred_check_branch
      %226 = sbr.rel (0) target = $region17
    $region16: #{tpu_custom_call.1} parent=1 // pred_region
      %s228 = ssub.s32 2048, 2048
      %229 = vsyncadd [#allocation3], %s228
      %s230 = sshll.u32 [#allocation2], 4
      %s231 = int_to_ptr.vmem [resolvable:$true] %s230
      %236 = dma.vmem_to_hbm [thread:$0]  %s231, 2048, %s3, [#allocation3], 128, 128, 8
    $region17: #{tpu_custom_call.1} parent=1 // pred_fallthru
      _
    // Predicated region
    $region18: #{tpu_custom_call.1} parent=1 // pred_check
      _
    $region19: #{tpu_custom_call.1} parent=1 // pred_check_branch
      %238 = sbr.rel (0) target = $region21
    $region20: #{tpu_custom_call.1} parent=1 // pred_region
      %239 = dma.done [#allocation3], 2048
    $region21: #{tpu_custom_call.1} parent=1 // pred_fallthru
      _
    %240 = vsyncpa [#allocation3], 1

</llo_original>
